<compile_context>
chip_gen: v6e
topology: v6e:2x2x1
jax: 0.10.0
libtpu: 0.0.40
codegen_flags: <defaults>
</compile_context>

<pallas_src>
import functools
import math

import jax
import jax.numpy as jnp
from jax.experimental import pallas as pl
from jax.experimental.pallas import tpu as pltpu


def _qkv_proj_kernel(x_ref, w_ref, b_ref, o_ref):
    # x: (TM, H), w: (H, 3H), b: (1, 3H) -> o: (TM, 3H); f32 accumulate on MXU.
    o_ref[...] = (jnp.dot(x_ref[...], w_ref[...],
                          preferred_element_type=jnp.float32)
                  + b_ref[...]).astype(o_ref.dtype)


def _attention_kernel(q_ref, k_ref, v_ref, mask_ref, o_ref, *, scale):
    # q/k/v: (NH, S, HD) for one batch element; mask: (1, S) additive (HF style).
    q = q_ref[...]
    k = k_ref[...]
    v = v_ref[...]
    # scores: (NH, S_q, S_k), batched matmul on the MXU, f32 accumulate.
    s = jnp.einsum('nqd,nkd->nqk', q, k,
                   preferred_element_type=jnp.float32) * scale
    s = s + mask_ref[...]                       # broadcast over heads & queries
    m = jnp.max(s, axis=-1, keepdims=True)
    e = jnp.exp(s - m)
    p = e / jnp.sum(e, axis=-1, keepdims=True)  # softmax, kept in f32
    # TODO(synk): attention-prob dropout is identity at inference; the elided
    # "TOPIC ATTENTION" block (query_topic/key_topic/value_topic/linear_topic_w)
    # does not appear in the module's visible forward code.
    ctx = jnp.einsum('nqk,nkd->nqd', p.astype(v.dtype), v,
                     preferred_element_type=jnp.float32)
    o_ref[...] = ctx.astype(o_ref.dtype)


def roberta_self_attention_topic_aware(hidden_states, attention_mask, params,
                                       *, num_heads):
    """hidden_states: [B, S, H] f32; attention_mask: [B, S] additive f32.
    Returns context_layer [B, S, H] f32 (== outputs[0] of the PyTorch module)."""
    B, S, H = hidden_states.shape
    assert H % num_heads == 0
    hd = H // num_heads
    scale = 1.0 / math.sqrt(hd)

    # ---- Kernel 1: fused QKV projection over flattened M = B*S rows ----
    M = B * S
    # Biggest M tile that divides M (128-512 preferred at real sizes).
    TM = next((t for t in (512, 256, 128) if M % t == 0), M)
    x2d = hidden_states.reshape(M, H)
    # PyTorch Linear is y = x @ W.T + b; pre-transpose + concat -> one matmul.
    w_qkv = jnp.concatenate(
        [params["wq"].T, params["wk"].T, params["wv"].T], axis=1)      # (H, 3H)
    b_qkv = jnp.concatenate(
        [params["bq"], params["bk"], params["bv"]]).reshape(1, 3 * H)  # (1, 3H)

    qkv = pl.pallas_call(
        _qkv_proj_kernel,
        out_shape=jax.ShapeDtypeStruct((M, 3 * H), jnp.float32),
        grid_spec=pltpu.PrefetchScalarGridSpec(
            num_scalar_prefetch=0,
            grid=(M // TM,),
            in_specs=[
                pl.BlockSpec((TM, H), lambda i: (i, 0)),
                pl.BlockSpec((H, 3 * H), lambda i: (0, 0)),   # grid-invariant
                pl.BlockSpec((1, 3 * H), lambda i: (0, 0)),   # grid-invariant
            ],
            out_specs=pl.BlockSpec((TM, 3 * H), lambda i: (i, 0)),
        ),
        compiler_params=pltpu.CompilerParams(
            dimension_semantics=("parallel",)),
    )(x2d, w_qkv, b_qkv)

    # ---- transpose_for_scores (layout plumbing, plain JAX) ----
    q, k, v = jnp.split(qkv, 3, axis=1)

    def to_heads(t):  # (M, H) -> (B, NH, S, HD)
        return t.reshape(B, S, num_heads, hd).transpose(0, 2, 1, 3)

    qh, kh, vh = to_heads(q), to_heads(k), to_heads(v)

    # ---- Kernel 2: attention, grid over batch, all heads per grid step ----
    head_spec = pl.BlockSpec((None, num_heads, S, hd),
                             lambda b: (b, 0, 0, 0))
    ctx = pl.pallas_call(
        functools.partial(_attention_kernel, scale=scale),
        out_shape=jax.ShapeDtypeStruct((B, num_heads, S, hd), jnp.float32),
        grid_spec=pltpu.PrefetchScalarGridSpec(
            num_scalar_prefetch=0,
            grid=(B,),
            in_specs=[head_spec, head_spec, head_spec,
                      pl.BlockSpec((1, S), lambda b: (b, 0))],
            out_specs=head_spec,
        ),
        compiler_params=pltpu.CompilerParams(
            dimension_semantics=("parallel",)),
    )(qh, kh, vh, attention_mask)

    # merge heads back: (B, NH, S, HD) -> (B, S, H)
    context_layer = ctx.transpose(0, 2, 1, 3).reshape(B, S, H)
    return context_layer


def _reference(hidden_states, attention_mask, params, *, num_heads):
    """Pure-JAX mirror of the PyTorch forward (absolute positions, no decoder)."""
    B, S, H = hidden_states.shape
    hd = H // num_heads
    hp = jax.lax.Precision.HIGHEST
    q = jnp.einsum('bsh,oh->bso', hidden_states, params["wq"], precision=hp) + params["bq"]
    k = jnp.einsum('bsh,oh->bso', hidden_states, params["wk"], precision=hp) + params["bk"]
    v = jnp.einsum('bsh,oh->bso', hidden_states, params["wv"], precision=hp) + params["bv"]

    def tfs(x):
        return x.reshape(B, S, num_heads, hd).transpose(0, 2, 1, 3)

    qh, kh, vh = tfs(q), tfs(k), tfs(v)
    scores = jnp.einsum('bnqd,bnkd->bnqk', qh, kh, precision=hp) / math.sqrt(hd)
    scores = scores + attention_mask[:, None, None, :]
    probs = jax.nn.softmax(scores, axis=-1)
    ctx = jnp.einsum('bnqk,bnkd->bnqd', probs, vh, precision=hp)
    return ctx.transpose(0, 2, 1, 3).reshape(B, S, H)


if __name__ == "__main__":
    B, S, HIDDEN, NUM_HEADS = 2, 8, 32, 4

    key = jax.random.PRNGKey(0)
    k_h, k_q, k_k, k_v = jax.random.split(key, 4)

    def linear_init(k, out_f, in_f):
        kw, kb = jax.random.split(k)
        bound = 1.0 / math.sqrt(in_f)
        w = jax.random.uniform(kw, (out_f, in_f), jnp.float32, -bound, bound)
        b = jax.random.uniform(kb, (out_f,), jnp.float32, -bound, bound)
        return w, b

    wq, bq = linear_init(k_q, HIDDEN, HIDDEN)
    wk, bk = linear_init(k_k, HIDDEN, HIDDEN)
    wv, bv = linear_init(k_v, HIDDEN, HIDDEN)
    params = {"wq": wq, "bq": bq, "wk": wk, "bk": bk, "wv": wv, "bv": bv}

    hidden_states = jax.random.normal(k_h, (B, S, HIDDEN), jnp.float32)

    # HF-style additive attention mask (0 = attend, large negative = padded);
    # pad out the last two key positions of batch element 1.
    key_valid = jnp.ones((B, S), jnp.float32).at[1, S - 2:].set(0.0)
    attention_mask = (1.0 - key_valid) * (-1e9)

    out = roberta_self_attention_topic_aware(
        hidden_states, attention_mask, params, num_heads=NUM_HEADS)
    jax.block_until_ready(out)

    ref = _reference(hidden_states, attention_mask, params,
                     num_heads=NUM_HEADS)
    assert out.shape == (B, S, HIDDEN)
    max_err = float(jnp.max(jnp.abs(out - ref)))
    assert jnp.allclose(out, ref, atol=1e-3, rtol=1e-3), max_err

    print("KERNEL_OK")
</pallas_src>

<mosaic_0001>
module attributes {stable_mosaic.version = 11 : i64} {
  func.func @_qkv_proj_kernel(%arg0: i32, %arg1: memref<16x32xf32, #tpu.memory_space<vmem>>, %arg2: memref<32x96xf32, #tpu.memory_space<vmem>>, %arg3: memref<1x96xf32, #tpu.memory_space<vmem>>, %arg4: memref<16x96xf32, #tpu.memory_space<vmem>>) attributes {dimension_semantics = [#tpu.dimension_semantics<parallel>], iteration_bounds = array<i64: 1>, scalar_prefetch = 0 : i64, scratch_operands = 0 : i64, tpu.core_type = #tpu.core_type<tc>, window_params = [{transform_indices = @transform_0, window_bounds = array<i64: 16, 32>}, {pipeline_mode = #tpu.pipeline_mode<synchronous>, transform_indices = @transform_1, window_bounds = array<i64: 32, 96>}, {pipeline_mode = #tpu.pipeline_mode<synchronous>, transform_indices = @transform_2, window_bounds = array<i64: 1, 96>}, {transform_indices = @transform_3, window_bounds = array<i64: 16, 96>}]} {
    %c0 = arith.constant 0 : index
    %c0_0 = arith.constant 0 : index
    %0 = vector.load %arg1[%c0, %c0_0] : memref<16x32xf32, #tpu.memory_space<vmem>>, vector<16x32xf32>
    %c0_1 = arith.constant 0 : index
    %c0_2 = arith.constant 0 : index
    %1 = vector.load %arg2[%c0_1, %c0_2] : memref<32x96xf32, #tpu.memory_space<vmem>>, vector<32x96xf32>
    %cst = arith.constant dense<0.000000e+00> : vector<16x96xf32>
    %2 = tpu.matmul %0, %1, %cst {dimension_numbers = #tpu.dot_dimension_numbers<[1], [0], [0], [1], [0, 0, 1, 1], [], []>} : vector<16x32xf32>, vector<32x96xf32>, vector<16x96xf32> -> vector<16x96xf32>
    %c0_3 = arith.constant 0 : index
    %c0_4 = arith.constant 0 : index
    %3 = vector.load %arg3[%c0_3, %c0_4] : memref<1x96xf32, #tpu.memory_space<vmem>>, vector<1x96xf32>
    %4 = vector.broadcast %3 : vector<1x96xf32> to vector<16x96xf32>
    %5 = arith.addf %2, %4 : vector<16x96xf32>
    %c0_5 = arith.constant 0 : index
    %c0_6 = arith.constant 0 : index
    %6 = vector.load %arg4[%c0_5, %c0_6] : memref<16x96xf32, #tpu.memory_space<vmem>>, vector<16x96xf32>
    tpu.vector_store %arg4[%c0_5, %c0_6], %5 {strides = array<i32>} : memref<16x96xf32, #tpu.memory_space<vmem>>, vector<16x96xf32>,
    return
  }
  func.func @transform_0(%arg0: i32) -> (i32, i32) {
    %c0_i32 = arith.constant 0 : i32
    %c0_i32_0 = arith.constant 0 : i32
    return %arg0, %c0_i32 : i32, i32
  }
  func.func @transform_1(%arg0: i32) -> (i32, i32) {
    %c0_i32 = arith.constant 0 : i32
    %c0_i32_0 = arith.constant 0 : i32
    %c0_i32_1 = arith.constant 0 : i32
    return %c0_i32, %c0_i32_0 : i32, i32
  }
  func.func @transform_2(%arg0: i32) -> (i32, i32) {
    %c0_i32 = arith.constant 0 : i32
    %c0_i32_0 = arith.constant 0 : i32
    %c0_i32_1 = arith.constant 0 : i32
    return %c0_i32, %c0_i32_0 : i32, i32
  }
  func.func @transform_3(%arg0: i32) -> (i32, i32) {
    %c0_i32 = arith.constant 0 : i32
    %c0_i32_0 = arith.constant 0 : i32
    return %arg0, %c0_i32 : i32, i32
  }
}

</mosaic_0001>

<llo_original>
// kernel: tpu_custom_call.1
$region0: #{tpu_custom_call.1}
  #allocation0 [shape = 'u32[]', space=smem, size = 0x4, offset = 0x4, fixed_abs, tag = 'smem constant byte address 0x4 - core index']
  #allocation1 [shape = 'u32[144,128]{1,0:T(1,128)}', space=vmem, size = 0x12000, scoped, tag = 'internal scratch']
  %s0 = inlined_call_operand.hbm [shape: f32[16,32], index: 0, kind: input, shape index: {}]
  %s1 = inlined_call_operand.hbm [shape: f32[32,96], index: 1, kind: input, shape index: {}]
  %s2 = inlined_call_operand.vmem [shape: f32[1,96], index: 2, kind: input, shape index: {}]
  %s3 = inlined_call_operand.hbm [shape: f32[16,96], index: 3, kind: output, shape index: {}]
  %s4 = sld [smem:[#allocation0]]
  $region30: #{tpu_custom_call.1} parent=0
    _
  %s6 = ssub.s32 1, %s4
  %s7 = scalar_select 0, %s6, %s4
  $region1: #{tpu_custom_call.1} parent=0
    #allocation2 [shape = 'u8[8192]{0}', space=vmem, size = 0x2000, scoped, tag = 'input window, operand 0, single buffered']
    #allocation3 [shape = 's32[1]{0}', space=sflag, size = 0x4, scoped, tag = 'scoped memory for tpu_custom_call.1']
    #allocation4 [shape = 's32[1]{0}', space=sflag, size = 0x4, scoped, tag = 'scoped memory for tpu_custom_call.1']
    #allocation5 [shape = 'u8[16384]{0}', space=vmem, size = 0x4000, scoped, tag = 'input window, operand 1, single buffered']
    #allocation6 [shape = 's32[1]{0}', space=sflag, size = 0x4, scoped, tag = 'scoped memory for tpu_custom_call.1']
    #allocation7 [shape = 'u8[8192]{0}', space=vmem, size = 0x2000, scoped, tag = 'output window, operand 0, single buffered']
    %8 = vsyncpa [#allocation3], 0
    %9 = vsyncpa [#allocation6], 0
    %10 = vsyncpa [#allocation4], 0
    // Predicated region
    $region2: #{tpu_custom_call.1} parent=1 // pred_check
      _
    $region3: #{tpu_custom_call.1} parent=1 // pred_check_branch
      %12 = sbr.rel (0) target = $region5
    $region4: #{tpu_custom_call.1} parent=1 // pred_region
      %s14 = ssub.s32 256, 256
      %15 = vsyncadd [#allocation3], %s14
      %s16 = sshll.u32 [#allocation2], 4
      %s17 = int_to_ptr.vmem [resolvable:$true] %s16
      %22 = dma.hbm_to_vmem [thread:$0]  %s0, 256, %s17, [#allocation3], 128, 128, 8
    $region5: #{tpu_custom_call.1} parent=1 // pred_fallthru
      _
    // Predicated region
    $region6: #{tpu_custom_call.1} parent=1 // pred_check
      _
    $region7: #{tpu_custom_call.1} parent=1 // pred_check_branch
      %24 = sbr.rel (0) target = $region9
    $region8: #{tpu_custom_call.1} parent=1 // pred_region
      %s26 = ssub.s32 512, 512
      %27 = vsyncadd [#allocation6], %s26
      %s28 = sshll.u32 [#allocation5], 4
      %s29 = int_to_ptr.vmem [resolvable:$true] %s28
      %34 = dma.hbm_to_vmem [thread:$0]  %s1, 512, %s29, [#allocation6], 128, 128, 8
    $region9: #{tpu_custom_call.1} parent=1 // pred_fallthru
      _
    // Predicated region
    $region10: #{tpu_custom_call.1} parent=1 // pred_check
      _
    $region11: #{tpu_custom_call.1} parent=1 // pred_check_branch
      %36 = sbr.rel (0) target = $region13
    $region12: #{tpu_custom_call.1} parent=1 // pred_region
      _
    $region13: #{tpu_custom_call.1} parent=1 // pred_fallthru
      _
    // Predicated region
    $region14: #{tpu_custom_call.1} parent=1 // pred_check
      _
    $region15: #{tpu_custom_call.1} parent=1 // pred_check_branch
      %38 = sbr.rel (0) target = $region17
    $region16: #{tpu_custom_call.1} parent=1 // pred_region
      %39 = dma.done [#allocation3], 256
    $region17: #{tpu_custom_call.1} parent=1 // pred_fallthru
      _
    // Predicated region
    $region18: #{tpu_custom_call.1} parent=1 // pred_check
      _
    $region19: #{tpu_custom_call.1} parent=1 // pred_check_branch
      %41 = sbr.rel (0) target = $region21
    $region20: #{tpu_custom_call.1} parent=1 // pred_region
      %42 = dma.done [#allocation6], 512
    $region21: #{tpu_custom_call.1} parent=1 // pred_fallthru
      _
    %v43 = vld [vmem:[#allocation2] sm:$0xff]
    %v44 = vld [vmem:[#allocation2 + $0x8] sm:$0xff]
    %v45 = vld [vmem:[#allocation5] sm:$0xff]
    %v46 = vld [vmem:[#allocation5 + $0x8] sm:$0xff]
    %v47 = vld [vmem:[#allocation5 + $0x10] sm:$0xff]
    %v48 = vld [vmem:[#allocation5 + $0x18] sm:$0xff]
    %v49 = vld [vmem:[%s2] sm:$0x1]
    %v51 = vlaneseq
    %v52 = vshrl.u32 %v51, 7
    %v53 = vsub.s32 0, %v52
    %v54 = vrot.slane %v49, %v53
    %vm56 = vcmask 261120
    %v58 = vsel %vm56, %v43, 0
    %v61 = vsel %vm56, %v44, 0
    %63 = vmatprep.subr.mxu0 0.0
    %64 = vmatpush1.msra.mxu0 0.0
    %65 = vmatprep.subr.mxu0 0.0
    %66 = vmatpush1.msra.mxu0 0.0
    %67 = vmatprep.subr.mxu0 0.0
    %68 = vmatpush1.msra.mxu0 0.0
    %69 = vmatprep.subr.mxu0 0.0
    %70 = vmatpush1.msra.mxu0 0.0
    %71 = vmatprep.subr.mxu0 0.0
    %72 = vmatpush1.msra.mxu0 0.0
    %73 = vmatprep.subr.mxu0 0.0
    %74 = vmatpush1.msra.mxu0 0.0
    %75 = vmatprep.subr.mxu0 0.0
    %76 = vmatpush1.msra.mxu0 0.0
    %77 = vmatprep.subr.mxu0 0.0
    %78 = vmatpush1.msra.mxu0 0.0
    %79 = vmatprep.subr.mxu0 0.0
    %80 = vmatpush1.msra.mxu0 0.0
    %81 = vmatprep.subr.mxu0 0.0
    %82 = vmatpush1.msra.mxu0 0.0
    %83 = vmatprep.subr.mxu0 0.0
    %84 = vmatpush1.msra.mxu0 0.0
    %85 = vmatprep.subr.mxu0 0.0
    %86 = vmatpush1.msra.mxu0 0.0
    %87 = vmatprep.subr.mxu0 0.0
    %88 = vmatpush1.msra.mxu0 %v48
    %89 = vmatprep.subr.mxu0 0.0
    %90 = vmatpush1.msra.mxu0 %v47
    %91 = vmatprep.subr.mxu0 0.0
    %92 = vmatpush1.msra.mxu0 %v46
    %93 = vmatprep.subr.mxu0 0.0
    %94 = vmatpush1.msra.mxu0 %v45
    %95 = vmatprep.subr.mxu0 0.0
    %96 = vmatpush2.msra.mxu0 0.0
    %97 = vmatprep.subr.mxu0 0.0
    %98 = vmatpush2.msra.mxu0 0.0
    %99 = vmatprep.subr.mxu0 0.0
    %100 = vmatpush2.msra.mxu0 0.0
    %101 = vmatprep.subr.mxu0 0.0
    %102 = vmatpush2.msra.mxu0 0.0
    %103 = vmatprep.subr.mxu0 0.0
    %104 = vmatpush2.msra.mxu0 0.0
    %105 = vmatprep.subr.mxu0 0.0
    %106 = vmatpush2.msra.mxu0 0.0
    %107 = vmatprep.subr.mxu0 0.0
    %108 = vmatpush2.msra.mxu0 0.0
    %109 = vmatprep.subr.mxu0 0.0
    %110 = vmatpush2.msra.mxu0 0.0
    %111 = vmatprep.subr.mxu0 0.0
    %112 = vmatpush2.msra.mxu0 0.0
    %113 = vmatprep.subr.mxu0 0.0
    %114 = vmatpush2.msra.mxu0 0.0
    %115 = vmatprep.subr.mxu0 0.0
    %116 = vmatpush2.msra.mxu0 0.0
    %117 = vmatprep.subr.mxu0 0.0
    %118 = vmatpush2.msra.mxu0 0.0
    %119 = vmatprep.subr.mxu0 0.0
    %120 = vmatpush2.msra.mxu0 0.0
    %121 = vmatprep.subr.mxu0 0.0
    %122 = vmatpush2.msra.mxu0 0.0
    %123 = vmatprep.subr.mxu0 0.0
    %124 = vmatpush2.msra.mxu0 0.0
    %125 = vmatprep.subr.mxu0 0.0
    %126 = vmatpush2.msra.mxu0 0.0
    %127 = vmatprep.mubr.f32.mxu0 0.0
    %128 = vmatmul.mubr.f32.gmra.mxu0 %v58
    %v129 = vpop.f32.mrf.mxu0
    %v130 = vadd.f32 %v54, %v129
    %v131 = vpop.f32.mrf.mxu0
    %132 = vmatprep.mubr.f32.mxu0 0.0
    %133 = vmatmul.mubr.f32.gmra.mxu0 %v61
    %v134 = vpop.f32.mrf.mxu0
    %v135 = vadd.f32 %v54, %v134
    %v136 = vpop.f32.mrf.mxu0
    %137 = vdwg.mxu0
    %vm138 = vcmask 785408
    %139 = vst.msk [vmem:[#allocation7] sm:$0xff] %vm138, %v130
    %140 = vst.msk [vmem:[#allocation7 + $0x8] sm:$0xff] %vm138, %v135
    // Predicated region
    $region22: #{tpu_custom_call.1} parent=1 // pred_check
      _
    $region23: #{tpu_custom_call.1} parent=1 // pred_check_branch
      %142 = sbr.rel (0) target = $region25
    $region24: #{tpu_custom_call.1} parent=1 // pred_region
      %s144 = ssub.s32 256, 256
      %145 = vsyncadd [#allocation4], %s144
      %s146 = sshll.u32 [#allocation7], 4
      %s147 = int_to_ptr.vmem [resolvable:$true] %s146
      %152 = dma.vmem_to_hbm [thread:$0]  %s147, 256, %s3, [#allocation4], 128, 128, 8
    $region25: #{tpu_custom_call.1} parent=1 // pred_fallthru
      _
    // Predicated region
    $region26: #{tpu_custom_call.1} parent=1 // pred_check
      _
    $region27: #{tpu_custom_call.1} parent=1 // pred_check_branch
      %154 = sbr.rel (0) target = $region29
    $region28: #{tpu_custom_call.1} parent=1 // pred_region
      %155 = dma.done [#allocation4], 256
    $region29: #{tpu_custom_call.1} parent=1 // pred_fallthru
      _
    %156 = vsyncpa [#allocation3], 1
    %157 = vsyncpa [#allocation6], 1
    %158 = vsyncpa [#allocation4], 1

</llo_original>
